<compile_context>
chip_gen: v7x
topology: tpu7x:2x2x1
jax: 0.10.0
libtpu: 0.0.40
codegen_flags: <defaults>
</compile_context>

<pallas_src>
import jax
import jax.numpy as jnp
from jax.experimental import pallas as pl
from jax.experimental.pallas import tpu as pltpu


# ----------------------------- Pallas kernel -------------------------------

def similarity2_kernel(q_ref,      # VMEM [tb, mem]
                       t_ref,      # VMEM [tb, mem]
                       wbil_ref,   # VMEM [mem, mem*mem]   (W[o,i,j] -> [i, o*mem+j])
                       bbil_ref,   # VMEM [1, mem]
                       sel_ref,    # VMEM [mem*mem, mem]   segment-sum matrix
                       wp_ref,     # VMEM [mem, C_pad]     (wp weight transposed, padded)
                       bp_ref,     # VMEM [1, C_pad]       (bias, -1e30 in padded lanes)
                       out_ref):   # VMEM [tb, C_pad]
    q = q_ref[...]                          # [tb, mem]
    t = t_ref[...]                          # [tb, mem]
    mem = q.shape[1]

    # Bilinear: out[b,o] = sum_{i,j} q[b,i] * W[o,i,j] * t[b,j] + b_bil[o]
    # Step 1 (MXU): tmp[b, o*mem + j] = sum_i q[b,i] * W[o,i,j]
    tmp = jnp.dot(q, wbil_ref[...], preferred_element_type=jnp.float32)   # [tb, mem*mem]
    # Step 2 (VPU): multiply by t replicated per output channel (co-issues with MXU).
    t_tiled = jnp.tile(t, (1, mem))         # t_tiled[b, o*mem + j] = t[b, j]
    prod = tmp * t_tiled                    # [tb, mem*mem]
    # Step 3 (MXU): segment-sum over j via constant selection matrix
    # sel[o*mem + j, o'] = 1 iff o == o'  -> lane axis stays dense, no reshape.
    bil = jnp.dot(prod, sel_ref[...], preferred_element_type=jnp.float32) + bbil_ref[...]

    # ReLU
    act = jnp.maximum(bil, 0.0)             # [tb, mem]

    # wp linear (N = C_pad = 128 -> full-width MXU, unmasked stores).
    # Padded lanes get logit ~ -1e30, so exp() underflows to exactly 0 and the
    # log_softmax over the real classes is unchanged.
    logits = jnp.dot(act, wp_ref[...], preferred_element_type=jnp.float32) + bp_ref[...]

    # numerically stable log_softmax along the (padded) class axis
    m = jnp.max(logits, axis=-1, keepdims=True)
    shifted = logits - m
    lse = jnp.log(jnp.sum(jnp.exp(shifted), axis=-1, keepdims=True))
    out_ref[...] = shifted - lse


# ------------------------------- wrapper ------------------------------------

def _pick_batch_tile(B, tb):
    """Pick a batch tile: one grid step for small batches, <=256 rows otherwise."""
    if tb is not None:
        return tb
    if B <= 256:
        return B                      # single grid step; block == full array dim
    t = 256
    while t > 8 and B % t != 0:
        t //= 2
    return t


def similarity2_pallas(query_state, target_state, w_bil, b_bil, w_p, b_p, *, tb=None):
    """query_state/target_state: [B, mem]; w_bil: [mem, mem, mem] (out,in1,in2);
    b_bil: [mem]; w_p: [C, mem]; b_p: [C]."""
    B, mem = query_state.shape
    C = w_p.shape[0]

    tb = _pick_batch_tile(B, tb)
    assert B % tb == 0, "batch must be a multiple of the batch tile"
    n_steps = B // tb

    # Lane-dense class dim: pad C up to a multiple of 128.
    C_pad = ((C + 127) // 128) * 128

    # Host-side weight prep (done once; constant index_maps keep them resident).
    wbil_flat = jnp.transpose(w_bil, (1, 0, 2)).reshape(mem, mem * mem)   # [i, o*mem+j]
    sel = jnp.repeat(jnp.eye(mem, dtype=jnp.float32), mem, axis=0)        # [mem*mem, mem]
    wp_pad = jnp.zeros((mem, C_pad), jnp.float32).at[:, :C].set(w_p.T.astype(jnp.float32))
    # -1e30 (NOT 0, NOT -inf) in padded lanes: exp underflows to 0, no NaN from inf-inf.
    bp_pad = jnp.full((1, C_pad), -1e30, jnp.float32).at[0, :C].set(b_p.astype(jnp.float32))
    bbil2 = b_bil.reshape(1, mem)

    grid_spec = pltpu.PrefetchScalarGridSpec(
        num_scalar_prefetch=0,
        grid=(n_steps,),
        in_specs=[
            pl.BlockSpec((tb, mem), lambda i: (i, 0)),           # query tile
            pl.BlockSpec((tb, mem), lambda i: (i, 0)),           # target tile
            pl.BlockSpec((mem, mem * mem), lambda i: (0, 0)),    # bilinear W (resident)
            pl.BlockSpec((1, mem), lambda i: (0, 0)),            # bilinear bias
            pl.BlockSpec((mem * mem, mem), lambda i: (0, 0)),    # segment-sum matrix
            pl.BlockSpec((mem, C_pad), lambda i: (0, 0)),        # wp weight (padded)
            pl.BlockSpec((1, C_pad), lambda i: (0, 0)),          # wp bias (padded)
        ],
        out_specs=pl.BlockSpec((tb, C_pad), lambda i: (i, 0)),
    )

    # Only shard across cores when there is actually more than one grid step;
    # a 1-step grid sharded over v7x's 2 TCs would just duplicate the resident
    # weight DMA for microseconds of work.
    dim_sem = ("parallel",) if n_steps > 1 else ("arbitrary",)

    out_pad = pl.pallas_call(
        similarity2_kernel,
        out_shape=jax.ShapeDtypeStruct((B, C_pad), jnp.float32),
        grid_spec=grid_spec,
        compiler_params=pltpu.CompilerParams(dimension_semantics=dim_sem),
    )(query_state, target_state, wbil_flat, bbil2, sel, wp_pad, bp_pad)

    return out_pad[:, :C]


# -------------------------- pure-JAX reference ------------------------------

def similarity2_ref(query_state, target_state, w_bil, b_bil, w_p, b_p):
    bil = jnp.einsum('bi,oij,bj->bo', query_state, w_bil, target_state) + b_bil
    act = jnp.maximum(bil, 0.0)
    logits = act @ w_p.T + b_p
    return jax.nn.log_softmax(logits, axis=-1)


# --------------------------------- main --------------------------------------

if __name__ == "__main__":
    mem_dim = 32
    num_classes = 5
    B = 16            # batch of (query, target) pairs -> single grid step

    key = jax.random.PRNGKey(0)
    k_q, k_t, k_wb, k_bb, k_wp, k_bp = jax.random.split(key, 6)

    query_state = jax.random.normal(k_q, (B, mem_dim), jnp.float32)
    target_state = jax.random.normal(k_t, (B, mem_dim), jnp.float32)

    # nn.Bilinear(mem, mem, mem): weight [out, in1, in2], bias [out]
    w_bil = jax.random.normal(k_wb, (mem_dim, mem_dim, mem_dim), jnp.float32) * (1.0 / mem_dim)
    b_bil = jax.random.normal(k_bb, (mem_dim,), jnp.float32) * 0.01
    # nn.Linear(mem, num_classes): weight [C, mem], bias [C]
    w_p = jax.random.normal(k_wp, (num_classes, mem_dim), jnp.float32) * (1.0 / jnp.sqrt(mem_dim))
    b_p = jax.random.normal(k_bp, (num_classes,), jnp.float32) * 0.01

    out = similarity2_pallas(query_state, target_state, w_bil, b_bil, w_p, b_p)
    out = jax.block_until_ready(out)

    ref = jax.block_until_ready(
        similarity2_ref(query_state, target_state, w_bil, b_bil, w_p, b_p))

    assert out.shape == (B, num_classes), out.shape
    max_err = float(jnp.max(jnp.abs(out - ref)))
    assert max_err < 1e-4, f"max abs error {max_err}"

    print("KERNEL_OK")
</pallas_src>

<mosaic_0001>
module attributes {stable_mosaic.version = 11 : i64} {
  func.func @similarity2_kernel(%arg0: i32, %arg1: memref<16x32xf32, #tpu.memory_space<vmem>>, %arg2: memref<16x32xf32, #tpu.memory_space<vmem>>, %arg3: memref<32x1024xf32, #tpu.memory_space<vmem>>, %arg4: memref<1x32xf32, #tpu.memory_space<vmem>>, %arg5: memref<1024x32xf32, #tpu.memory_space<vmem>>, %arg6: memref<32x128xf32, #tpu.memory_space<vmem>>, %arg7: memref<1x128xf32, #tpu.memory_space<vmem>>, %arg8: memref<16x128xf32, #tpu.memory_space<vmem>>) attributes {dimension_semantics = [#tpu.dimension_semantics<arbitrary>], iteration_bounds = array<i64: 1>, scalar_prefetch = 0 : i64, scratch_operands = 0 : i64, tpu.core_type = #tpu.core_type<tc>, window_params = [{transform_indices = @transform_0, window_bounds = array<i64: 16, 32>}, {transform_indices = @transform_1, window_bounds = array<i64: 16, 32>}, {pipeline_mode = #tpu.pipeline_mode<synchronous>, transform_indices = @transform_2, window_bounds = array<i64: 32, 1024>}, {pipeline_mode = #tpu.pipeline_mode<synchronous>, transform_indices = @transform_3, window_bounds = array<i64: 1, 32>}, {pipeline_mode = #tpu.pipeline_mode<synchronous>, transform_indices = @transform_4, window_bounds = array<i64: 1024, 32>}, {pipeline_mode = #tpu.pipeline_mode<synchronous>, transform_indices = @transform_5, window_bounds = array<i64: 32, 128>}, {pipeline_mode = #tpu.pipeline_mode<synchronous>, transform_indices = @transform_6, window_bounds = array<i64: 1, 128>}, {transform_indices = @transform_7, window_bounds = array<i64: 16, 128>}]} {
    %c0 = arith.constant 0 : index
    %c0_0 = arith.constant 0 : index
    %0 = vector.load %arg1[%c0, %c0_0] : memref<16x32xf32, #tpu.memory_space<vmem>>, vector<16x32xf32>
    %c0_1 = arith.constant 0 : index
    %c0_2 = arith.constant 0 : index
    %1 = vector.load %arg2[%c0_1, %c0_2] : memref<16x32xf32, #tpu.memory_space<vmem>>, vector<16x32xf32>
    %c0_3 = arith.constant 0 : index
    %c0_4 = arith.constant 0 : index
    %2 = vector.load %arg3[%c0_3, %c0_4] : memref<32x1024xf32, #tpu.memory_space<vmem>>, vector<32x1024xf32>
    %cst = arith.constant dense<0.000000e+00> : vector<16x1024xf32>
    %3 = tpu.matmul %0, %2, %cst {dimension_numbers = #tpu.dot_dimension_numbers<[1], [0], [0], [1], [0, 0, 1, 1], [], []>} : vector<16x32xf32>, vector<32x1024xf32>, vector<16x1024xf32> -> vector<16x1024xf32>
    %4 = tpu.concatenate %1, %1, %1, %1, %1, %1, %1, %1, %1, %1, %1, %1, %1, %1, %1, %1, %1, %1, %1, %1, %1, %1, %1, %1, %1, %1, %1, %1, %1, %1, %1, %1 in 1 : vector<16x32xf32>, vector<16x32xf32>, vector<16x32xf32>, vector<16x32xf32>, vector<16x32xf32>, vector<16x32xf32>, vector<16x32xf32>, vector<16x32xf32>, vector<16x32xf32>, vector<16x32xf32>, vector<16x32xf32>, vector<16x32xf32>, vector<16x32xf32>, vector<16x32xf32>, vector<16x32xf32>, vector<16x32xf32>, vector<16x32xf32>, vector<16x32xf32>, vector<16x32xf32>, vector<16x32xf32>, vector<16x32xf32>, vector<16x32xf32>, vector<16x32xf32>, vector<16x32xf32>, vector<16x32xf32>, vector<16x32xf32>, vector<16x32xf32>, vector<16x32xf32>, vector<16x32xf32>, vector<16x32xf32>, vector<16x32xf32>, vector<16x32xf32> -> vector<16x1024xf32>
    %5 = arith.mulf %3, %4 : vector<16x1024xf32>
    %c0_5 = arith.constant 0 : index
    %c0_6 = arith.constant 0 : index
    %6 = vector.load %arg5[%c0_5, %c0_6] : memref<1024x32xf32, #tpu.memory_space<vmem>>, vector<1024x32xf32>
    %cst_7 = arith.constant dense<0.000000e+00> : vector<16x32xf32>
    %7 = tpu.matmul %5, %6, %cst_7 {dimension_numbers = #tpu.dot_dimension_numbers<[1], [0], [0], [1], [0, 0, 1, 1], [], []>} : vector<16x1024xf32>, vector<1024x32xf32>, vector<16x32xf32> -> vector<16x32xf32>
    %c0_8 = arith.constant 0 : index
    %c0_9 = arith.constant 0 : index
    %8 = vector.load %arg4[%c0_8, %c0_9] : memref<1x32xf32, #tpu.memory_space<vmem>>, vector<1x32xf32>
    %9 = vector.broadcast %8 : vector<1x32xf32> to vector<16x32xf32>
    %10 = arith.addf %7, %9 : vector<16x32xf32>
    %cst_10 = arith.constant 0.000000e+00 : f32
    %11 = vector.broadcast %cst_10 : f32 to vector<16x32xf32>
    %12 = arith.maximumf %10, %11 : vector<16x32xf32>
    %c0_11 = arith.constant 0 : index
    %c0_12 = arith.constant 0 : index
    %13 = vector.load %arg6[%c0_11, %c0_12] : memref<32x128xf32, #tpu.memory_space<vmem>>, vector<32x128xf32>
    %cst_13 = arith.constant dense<0.000000e+00> : vector<16x128xf32>
    %14 = tpu.matmul %12, %13, %cst_13 {dimension_numbers = #tpu.dot_dimension_numbers<[1], [0], [0], [1], [0, 0, 1, 1], [], []>} : vector<16x32xf32>, vector<32x128xf32>, vector<16x128xf32> -> vector<16x128xf32>
    %c0_14 = arith.constant 0 : index
    %c0_15 = arith.constant 0 : index
    %15 = vector.load %arg7[%c0_14, %c0_15] : memref<1x128xf32, #tpu.memory_space<vmem>>, vector<1x128xf32>
    %16 = vector.broadcast %15 : vector<1x128xf32> to vector<16x128xf32>
    %17 = arith.addf %14, %16 : vector<16x128xf32>
    %cst_16 = arith.constant dense<0xFF800000> : vector<16xf32>
    %18 = vector.multi_reduction <maximumf>, %17, %cst_16 [1] : vector<16x128xf32> to vector<16xf32>
    %19 = vector.shape_cast %18 : vector<16xf32> to vector<16x1xf32>
    %20 = vector.broadcast %19 : vector<16x1xf32> to vector<16x128xf32>
    %21 = arith.subf %17, %20 : vector<16x128xf32>
    %22 = math.exp %21 : vector<16x128xf32>
    %cst_17 = arith.constant dense<0.000000e+00> : vector<16xf32>
    %23 = vector.multi_reduction <add>, %22, %cst_17 [1] : vector<16x128xf32> to vector<16xf32>
    %24 = vector.shape_cast %23 : vector<16xf32> to vector<16x1xf32>
    %25 = math.log %24 : vector<16x1xf32>
    %26 = vector.broadcast %25 : vector<16x1xf32> to vector<16x128xf32>
    %27 = arith.subf %21, %26 : vector<16x128xf32>
    %c0_18 = arith.constant 0 : index
    %c0_19 = arith.constant 0 : index
    %28 = vector.load %arg8[%c0_18, %c0_19] : memref<16x128xf32, #tpu.memory_space<vmem>>, vector<16x128xf32>
    tpu.vector_store %arg8[%c0_18, %c0_19], %27 {strides = array<i32>} : memref<16x128xf32, #tpu.memory_space<vmem>>, vector<16x128xf32>,
    return
  }
  func.func @transform_0(%arg0: i32) -> (i32, i32) {
    %c0_i32 = arith.constant 0 : i32
    %c0_i32_0 = arith.constant 0 : i32
    return %arg0, %c0_i32 : i32, i32
  }
  func.func @transform_1(%arg0: i32) -> (i32, i32) {
    %c0_i32 = arith.constant 0 : i32
    %c0_i32_0 = arith.constant 0 : i32
    return %arg0, %c0_i32 : i32, i32
  }
  func.func @transform_2(%arg0: i32) -> (i32, i32) {
    %c0_i32 = arith.constant 0 : i32
    %c0_i32_0 = arith.constant 0 : i32
    %c0_i32_1 = arith.constant 0 : i32
    return %c0_i32, %c0_i32_0 : i32, i32
  }
  func.func @transform_3(%arg0: i32) -> (i32, i32) {
    %c0_i32 = arith.constant 0 : i32
    %c0_i32_0 = arith.constant 0 : i32
    %c0_i32_1 = arith.constant 0 : i32
    return %c0_i32, %c0_i32_0 : i32, i32
  }
  func.func @transform_4(%arg0: i32) -> (i32, i32) {
    %c0_i32 = arith.constant 0 : i32
    %c0_i32_0 = arith.constant 0 : i32
    %c0_i32_1 = arith.constant 0 : i32
    return %c0_i32, %c0_i32_0 : i32, i32
  }
  func.func @transform_5(%arg0: i32) -> (i32, i32) {
    %c0_i32 = arith.constant 0 : i32
    %c0_i32_0 = arith.constant 0 : i32
    %c0_i32_1 = arith.constant 0 : i32
    return %c0_i32, %c0_i32_0 : i32, i32
  }
  func.func @transform_6(%arg0: i32) -> (i32, i32) {
    %c0_i32 = arith.constant 0 : i32
    %c0_i32_0 = arith.constant 0 : i32
    %c0_i32_1 = arith.constant 0 : i32
    return %c0_i32, %c0_i32_0 : i32, i32
  }
  func.func @transform_7(%arg0: i32) -> (i32, i32) {
    %c0_i32 = arith.constant 0 : i32
    %c0_i32_0 = arith.constant 0 : i32
    return %arg0, %c0_i32 : i32, i32
  }
}

</mosaic_0001>

<llo_original>
// kernel: tpu_custom_call.1
$region0: #{tpu_custom_call.1}
  #allocation0 [shape = 'u32[]', space=smem, size = 0x4, offset = 0x4, fixed_abs, tag = 'smem constant byte address 0x4 - core index']
  #allocation1 [shape = 'u32[144,128]{1,0:T(1,128)}', space=vmem, size = 0x12000, scoped, tag = 'internal scratch']
  %s0 = inlined_call_operand.vmem [shape: f32[16,32], index: 0, kind: input, shape index: {}]
  %s1 = inlined_call_operand.vmem [shape: f32[16,32], index: 1, kind: input, shape index: {}]
  %s2 = inlined_call_operand.vmem [shape: f32[32,1024], index: 2, kind: input, shape index: {}]
  %s3 = inlined_call_operand.vmem [shape: f32[1,32], index: 3, kind: input, shape index: {}]
  %s4 = inlined_call_operand.vmem [shape: f32[1024,32], index: 4, kind: input, shape index: {}]
  %s5 = inlined_call_operand.vmem [shape: f32[32,128], index: 5, kind: input, shape index: {}]
  %s6 = inlined_call_operand.vmem [shape: f32[1,128], index: 6, kind: input, shape index: {}]
  %s7 = inlined_call_operand.hbm [shape: f32[16,128], index: 7, kind: output, shape index: {}]
  %s8 = sld [smem:[#allocation0]]
  $region38: #{tpu_custom_call.1} parent=0
    _
  %s10 = ssub.s32 1, %s8
  %s11 = scalar_select 0, %s10, %s8
  $region1: #{tpu_custom_call.1} parent=0
    #allocation2 [shape = 'u8[8192]{0}', space=vmem, size = 0x2000, scoped, tag = 'output window, operand 0, single buffered']
    #allocation3 [shape = 's32[1]{0}', space=sflag, size = 0x4, scoped, tag = 'scoped memory for tpu_custom_call.1']
    %12 = vsyncpa [#allocation3], 0
    // Predicated region
    $region2: #{tpu_custom_call.1} parent=1 // pred_check
      _
    $region3: #{tpu_custom_call.1} parent=1 // pred_check_branch
      %14 = sbr.rel (0) target = $region5
    $region4: #{tpu_custom_call.1} parent=1 // pred_region
      _
    $region5: #{tpu_custom_call.1} parent=1 // pred_fallthru
      _
    // Predicated region
    $region6: #{tpu_custom_call.1} parent=1 // pred_check
      _
    $region7: #{tpu_custom_call.1} parent=1 // pred_check_branch
      %16 = sbr.rel (0) target = $region9
    $region8: #{tpu_custom_call.1} parent=1 // pred_region
      _
    $region9: #{tpu_custom_call.1} parent=1 // pred_fallthru
      _
    // Predicated region
    $region10: #{tpu_custom_call.1} parent=1 // pred_check
      _
    $region11: #{tpu_custom_call.1} parent=1 // pred_check_branch
      %18 = sbr.rel (0) target = $region13
    $region12: #{tpu_custom_call.1} parent=1 // pred_region
      _
    $region13: #{tpu_custom_call.1} parent=1 // pred_fallthru
      _
    // Predicated region
    $region14: #{tpu_custom_call.1} parent=1 // pred_check
      _
    $region15: #{tpu_custom_call.1} parent=1 // pred_check_branch
      %20 = sbr.rel (0) target = $region17
    $region16: #{tpu_custom_call.1} parent=1 // pred_region
      _
    $region17: #{tpu_custom_call.1} parent=1 // pred_fallthru
      _
    // Predicated region
    $region18: #{tpu_custom_call.1} parent=1 // pred_check
      _
    $region19: #{tpu_custom_call.1} parent=1 // pred_check_branch
      %22 = sbr.rel (0) target = $region21
    $region20: #{tpu_custom_call.1} parent=1 // pred_region
      _
    $region21: #{tpu_custom_call.1} parent=1 // pred_fallthru
      _
    // Predicated region
    $region22: #{tpu_custom_call.1} parent=1 // pred_check
      _
    $region23: #{tpu_custom_call.1} parent=1 // pred_check_branch
      %24 = sbr.rel (0) target = $region25
    $region24: #{tpu_custom_call.1} parent=1 // pred_region
      _
    $region25: #{tpu_custom_call.1} parent=1 // pred_fallthru
      _
    // Predicated region
    $region26: #{tpu_custom_call.1} parent=1 // pred_check
      _
    $region27: #{tpu_custom_call.1} parent=1 // pred_check_branch
      %26 = sbr.rel (0) target = $region29
    $region28: #{tpu_custom_call.1} parent=1 // pred_region
      _
    $region29: #{tpu_custom_call.1} parent=1 // pred_fallthru
      _
    %v27 = vld [vmem:[%s0] sm:$0xff]
    %v28 = vld [vmem:[%s0 + $0x8] sm:$0xff]
    %v29 = vld [vmem:[%s1] sm:$0xff]
    %v30 = vld [vmem:[%s1 + $0x8] sm:$0xff]
    %v31 = vld [vmem:[%s2] sm:$0xff]
    %v32 = vld [vmem:[%s2 + $0x8] sm:$0xff]
    %v33 = vld [vmem:[%s2 + $0x10] sm:$0xff]
    %v34 = vld [vmem:[%s2 + $0x18] sm:$0xff]
    %v35 = vld [vmem:[%s2 + $0x20] sm:$0xff]
    %v36 = vld [vmem:[%s2 + $0x28] sm:$0xff]
    %v37 = vld [vmem:[%s2 + $0x30] sm:$0xff]
    %v38 = vld [vmem:[%s2 + $0x38] sm:$0xff]
    %v39 = vld [vmem:[%s2 + $0x40] sm:$0xff]
    %v40 = vld [vmem:[%s2 + $0x48] sm:$0xff]
    %v41 = vld [vmem:[%s2 + $0x50] sm:$0xff]
    %v42 = vld [vmem:[%s2 + $0x58] sm:$0xff]
    %v43 = vld [vmem:[%s2 + $0x60] sm:$0xff]
    %v44 = vld [vmem:[%s2 + $0x68] sm:$0xff]
    %v45 = vld [vmem:[%s2 + $0x70] sm:$0xff]
    %v46 = vld [vmem:[%s2 + $0x78] sm:$0xff]
    %v47 = vld [vmem:[%s2 + $0x80] sm:$0xff]
    %v48 = vld [vmem:[%s2 + $0x88] sm:$0xff]
    %v49 = vld [vmem:[%s2 + $0x90] sm:$0xff]
    %v50 = vld [vmem:[%s2 + $0x98] sm:$0xff]
    %v51 = vld [vmem:[%s2 + $0xa0] sm:$0xff]
    %v52 = vld [vmem:[%s2 + $0xa8] sm:$0xff]
    %v53 = vld [vmem:[%s2 + $0xb0] sm:$0xff]
    %v54 = vld [vmem:[%s2 + $0xb8] sm:$0xff]
    %v55 = vld [vmem:[%s2 + $0xc0] sm:$0xff]
    %v56 = vld [vmem:[%s2 + $0xc8] sm:$0xff]
    %v57 = vld [vmem:[%s2 + $0xd0] sm:$0xff]
    %v58 = vld [vmem:[%s2 + $0xd8] sm:$0xff]
    %v59 = vld [vmem:[%s2 + $0xe0] sm:$0xff]
    %v60 = vld [vmem:[%s2 + $0xe8] sm:$0xff]
    %v61 = vld [vmem:[%s2 + $0xf0] sm:$0xff]
    %v62 = vld [vmem:[%s2 + $0xf8] sm:$0xff]
    %vm63 = vcmask 261120
    %v65 = vsel %vm63, %v27, 0
    %v68 = vsel %vm63, %v28, 0
    %70 = vmatprep.subr.mxu0 %v32
    %71 = vmatpush1.msra.mxu0 %v31
    %72 = vmatprep.subr.mxu0 %v40
    %73 = vmatpush1.msra.mxu0 %v39
    %74 = vmatprep.subr.mxu0 %v48
    %75 = vmatpush1.msra.mxu0 %v47
    %76 = vmatprep.subr.mxu0 %v56
    %77 = vmatpush1.msra.mxu0 %v55
    %78 = vmatprep.subr.mxu0 0.0
    %79 = vmatpush1.msra.mxu0 0.0
    %80 = vmatprep.subr.mxu0 0.0
    %81 = vmatpush1.msra.mxu0 0.0
    %82 = vmatprep.subr.mxu0 0.0
    %83 = vmatpush1.msra.mxu0 0.0
    %84 = vmatprep.subr.mxu0 0.0
    %85 = vmatpush1.msra.mxu0 0.0
    %86 = vmatprep.subr.mxu0 0.0
    %87 = vmatpush1.msra.mxu0 0.0
    %88 = vmatprep.subr.mxu0 0.0
    %89 = vmatpush1.msra.mxu0 0.0
    %90 = vmatprep.subr.mxu0 0.0
    %91 = vmatpush1.msra.mxu0 0.0
    %92 = vmatprep.subr.mxu0 0.0
    %93 = vmatpush1.msra.mxu0 0.0
    %94 = vmatprep.subr.mxu0 0.0
    %95 = vmatpush1.msra.mxu0 0.0
    %96 = vmatprep.subr.mxu0 0.0
    %97 = vmatpush1.msra.mxu0 0.0
    %98 = vmatprep.subr.mxu0 0.0
    %99 = vmatpush1.msra.mxu0 0.0
    %100 = vmatprep.subr.mxu0 0.0
    %101 = vmatpush1.msra.mxu0 0.0
    %102 = vmatprep.subr.mxu0 0.0
    %103 = vmatpush1.msra.mxu0 0.0
    %104 = vmatprep.subr.mxu0 0.0
    %105 = vmatpush1.msra.mxu0 0.0
    %106 = vmatprep.subr.mxu0 0.0
    %107 = vmatpush1.msra.mxu0 0.0
    %108 = vmatprep.subr.mxu0 0.0
    %109 = vmatpush1.msra.mxu0 0.0
    %110 = vmatprep.subr.mxu0 0.0
    %111 = vmatpush1.msra.mxu0 0.0
    %112 = vmatprep.subr.mxu0 0.0
    %113 = vmatpush1.msra.mxu0 0.0
    %114 = vmatprep.subr.mxu0 0.0
    %115 = vmatpush1.msra.mxu0 0.0
    %116 = vmatprep.subr.mxu0 0.0
    %117 = vmatpush1.msra.mxu0 0.0
    %118 = vmatprep.subr.mxu0 0.0
    %119 = vmatpush1.msra.mxu0 0.0
    %120 = vmatprep.subr.mxu0 0.0
    %121 = vmatpush1.msra.mxu0 0.0
    %122 = vmatprep.subr.mxu0 0.0
    %123 = vmatpush1.msra.mxu0 0.0
    %124 = vmatprep.subr.mxu0 0.0
    %125 = vmatpush1.msra.mxu0 0.0
    %126 = vmatprep.subr.mxu0 0.0
    %127 = vmatpush1.msra.mxu0 0.0
    %128 = vmatprep.subr.mxu0 0.0
    %129 = vmatpush1.msra.mxu0 0.0
    %130 = vmatprep.subr.mxu0 0.0
    %131 = vmatpush1.msra.mxu0 0.0
    %132 = vmatprep.subr.mxu0 0.0
    %133 = vmatpush1.msra.mxu0 0.0
    %134 = vmatprep.mubr.f32.mxu0 0.0
    %135 = vmatmul.mubr.f32.gmra.mrb[0].mxu0 %v65
    %v136 = vpop.f32.mrb[0].mxu0
    %v137 = vadd.f32 0.0, %v136
    %v138 = vpop.f32.mrb[0].mxu0
    %v139 = vadd.f32 0.0, %v138
    %140 = vmatprep.mubr.f32.mxu0 0.0
    %141 = vmatmul.mubr.f32.gmra.mrb[0].mxu0 %v68
    %v142 = vpop.f32.mrb[0].mxu0
    %v143 = vadd.f32 0.0, %v142
    %v144 = vpop.f32.mrb[0].mxu0
    %v145 = vadd.f32 0.0, %v144
    %146 = vdwg.mxu0
    %147 = vmatprep.subr.mxu0 %v34
    %148 = vmatpush1.msra.mxu0 %v33
    %149 = vmatprep.subr.mxu0 %v42
    %150 = vmatpush1.msra.mxu0 %v41
    %151 = vmatprep.subr.mxu0 %v50
    %152 = vmatpush1.msra.mxu0 %v49
    %153 = vmatprep.subr.mxu0 %v58
    %154 = vmatpush1.msra.mxu0 %v57
    %155 = vmatprep.subr.mxu0 0.0
    %156 = vmatpush1.msra.mxu0 0.0
    %157 = vmatprep.subr.mxu0 0.0
    %158 = vmatpush1.msra.mxu0 0.0
    %159 = vmatprep.subr.mxu0 0.0
    %160 = vmatpush1.msra.mxu0 0.0
    %161 = vmatprep.subr.mxu0 0.0
    %162 = vmatpush1.msra.mxu0 0.0
    %163 = vmatprep.subr.mxu0 0.0
    %164 = vmatpush1.msra.mxu0 0.0
    %165 = vmatprep.subr.mxu0 0.0
    %166 = vmatpush1.msra.mxu0 0.0
    %167 = vmatprep.subr.mxu0 0.0
    %168 = vmatpush1.msra.mxu0 0.0
    %169 = vmatprep.subr.mxu0 0.0
    %170 = vmatpush1.msra.mxu0 0.0
    %171 = vmatprep.subr.mxu0 0.0
    %172 = vmatpush1.msra.mxu0 0.0
    %173 = vmatprep.subr.mxu0 0.0
    %174 = vmatpush1.msra.mxu0 0.0
    %175 = vmatprep.subr.mxu0 0.0
    %176 = vmatpush1.msra.mxu0 0.0
    %177 = vmatprep.subr.mxu0 0.0
    %178 = vmatpush1.msra.mxu0 0.0
    %179 = vmatprep.subr.mxu0 0.0
    %180 = vmatpush1.msra.mxu0 0.0
    %181 = vmatprep.subr.mxu0 0.0
    %182 = vmatpush1.msra.mxu0 0.0
    %183 = vmatprep.subr.mxu0 0.0
    %184 = vmatpush1.msra.mxu0 0.0
    %185 = vmatprep.subr.mxu0 0.0
    %186 = vmatpush1.msra.mxu0 0.0
    %187 = vmatprep.subr.mxu0 0.0
    %188 = vmatpush1.msra.mxu0 0.0
    %189 = vmatprep.subr.mxu0 0.0
    %190 = vmatpush1.msra.mxu0 0.0
    %191 = vmatprep.subr.mxu0 0.0
    %192 = vmatpush1.msra.mxu0 0.0
    %193 = vmatprep.subr.mxu0 0.0
    %194 = vmatpush1.msra.mxu0 0.0
    %195 = vmatprep.subr.mxu0 0.0
    %196 = vmatpush1.msra.mxu0 0.0
    %197 = vmatprep.subr.mxu0 0.0
    %198 = vmatpush1.msra.mxu0 0.0
    %199 = vmatprep.subr.mxu0 0.0
    %200 = vmatpush1.msra.mxu0 0.0
    %201 = vmatprep.subr.mxu0 0.0
    %202 = vmatpush1.msra.mxu0 0.0
    %203 = vmatprep.subr.mxu0 0.0
    %204 = vmatpush1.msra.mxu0 0.0
    %205 = vmatprep.subr.mxu0 0.0
    %206 = vmatpush1.msra.mxu0 0.0
    %207 = vmatprep.subr.mxu0 0.0
    %208 = vmatpush1.msra.mxu0 0.0
    %209 = vmatprep.subr.mxu0 0.0
    %210 = vmatpush1.msra.mxu0 0.0
    %211 = vmatprep.mubr.f32.mxu0 0.0
    %212 = vmatmul.mubr.f32.gmra.mrb[0].mxu0 %v65
    %v213 = vpop.f32.mrb[0].mxu0
    %v214 = vadd.f32 0.0, %v213
    %v215 = vpop.f32.mrb[0].mxu0
    %v216 = vadd.f32 0.0, %v215
    %217 = vmatprep.mubr.f32.mxu0 0.0
    %218 = vmatmul.mubr.f32.gmra.mrb[0].mxu0 %v68
    %v219 = vpop.f32.mrb[0].mxu0
    %v220 = vadd.f32 0.0, %v219
    %v221 = vpop.f32.mrb[0].mxu0
    %v222 = vadd.f32 0.0, %v221
    %223 = vdwg.mxu0
    %224 = vmatprep.subr.mxu0 %v36
    %225 = vmatpush1.msra.mxu0 %v35
    %226 = vmatprep.subr.mxu0 %v44
    %227 = vmatpush1.msra.mxu0 %v43
    %228 = vmatprep.subr.mxu0 %v52
    %229 = vmatpush1.msra.mxu0 %v51
    %230 = vmatprep.subr.mxu0 %v60
    %231 = vmatpush1.msra.mxu0 %v59
    %232 = vmatprep.subr.mxu0 0.0
    %233 = vmatpush1.msra.mxu0 0.0
    %234 = vmatprep.subr.mxu0 0.0
    %235 = vmatpush1.msra.mxu0 0.0
    %236 = vmatprep.subr.mxu0 0.0
    %237 = vmatpush1.msra.mxu0 0.0
    %238 = vmatprep.subr.mxu0 0.0
    %239 = vmatpush1.msra.mxu0 0.0
    %240 = vmatprep.subr.mxu0 0.0
    %241 = vmatpush1.msra.mxu0 0.0
    %242 = vmatprep.subr.mxu0 0.0
    %243 = vmatpush1.msra.mxu0 0.0
    %244 = vmatprep.subr.mxu0 0.0
    %245 = vmatpush1.msra.mxu0 0.0
    %246 = vmatprep.subr.mxu0 0.0
    %247 = vmatpush1.msra.mxu0 0.0
    %248 = vmatprep.subr.mxu0 0.0
    %249 = vmatpush1.msra.mxu0 0.0
    %250 = vmatprep.subr.mxu0 0.0
    %251 = vmatpush1.msra.mxu0 0.0
    %252 = vmatprep.subr.mxu0 0.0
    %253 = vmatpush1.msra.mxu0 0.0
    %254 = vmatprep.subr.mxu0 0.0
    %255 = vmatpush1.msra.mxu0 0.0
    %256 = vmatprep.subr.mxu0 0.0
    %257 = vmatpush1.msra.mxu0 0.0
    %258 = vmatprep.subr.mxu0 0.0
    %259 = vmatpush1.msra.mxu0 0.0
    %260 = vmatprep.subr.mxu0 0.0
    %261 = vmatpush1.msra.mxu0 0.0
    %262 = vmatprep.subr.mxu0 0.0
    %263 = vmatpush1.msra.mxu0 0.0
    %264 = vmatprep.subr.mxu0 0.0
    %265 = vmatpush1.msra.mxu0 0.0
    %266 = vmatprep.subr.mxu0 0.0
    %267 = vmatpush1.msra.mxu0 0.0
    %268 = vmatprep.subr.mxu0 0.0
    %269 = vmatpush1.msra.mxu0 0.0
    %270 = vmatprep.subr.mxu0 0.0
    %271 = vmatpush1.msra.mxu0 0.0
    %272 = vmatprep.subr.mxu0 0.0
    %273 = vmatpush1.msra.mxu0 0.0
    %274 = vmatprep.subr.mxu0 0.0
    %275 = vmatpush1.msra.mxu0 0.0
    %276 = vmatprep.subr.mxu0 0.0
    %277 = vmatpush1.msra.mxu0 0.0
    %278 = vmatprep.subr.mxu0 0.0
    %279 = vmatpush1.msra.mxu0 0.0
    %280 = vmatprep.subr.mxu0 0.0
    %281 = vmatpush1.msra.mxu0 0.0
    %282 = vmatprep.subr.mxu0 0.0
    %283 = vmatpush1.msra.mxu0 0.0
    %284 = vmatprep.subr.mxu0 0.0
    %285 = vmatpush1.msra.mxu0 0.0
    %286 = vmatprep.subr.mxu0 0.0
    %287 = vmatpush1.msra.mxu0 0.0
    %288 = vmatprep.mubr.f32.mxu0 0.0
    %289 = vmatmul.mubr.f32.gmra.mrb[0].mxu0 %v65
    %v290 = vpop.f32.mrb[0].mxu0
    %v291 = vadd.f32 0.0, %v290
    %v292 = vpop.f32.mrb[0].mxu0
    %v293 = vadd.f32 0.0, %v292
    %294 = vmatprep.mubr.f32.mxu0 0.0
    %295 = vmatmul.mubr.f32.gmra.mrb[0].mxu0 %v68
    %v296 = vpop.f32.mrb[0].mxu0
    %v297 = vadd.f32 0.0, %v296
    %v298 = vpop.f32.mrb[0].mxu0
    %v299 = vadd.f32 0.0, %v298
    %300 = vdwg.mxu0
    %301 = vmatprep.subr.mxu0 %v38
    %302 = vmatpush1.msra.mxu0 %v37
    %303 = vmatprep.subr.mxu0 %v46
    %304 = vmatpush1.msra.mxu0 %v45
    %305 = vmatprep.subr.mxu0 %v54
    %306 = vmatpush1.msra.mxu0 %v53
    %307 = vmatprep.subr.mxu0 %v62
    %308 = vmatpush1.msra.mxu0 %v61
    %309 = vmatprep.subr.mxu0 0.0
    %310 = vmatpush1.msra.mxu0 0.0
    %311 = vmatprep.subr.mxu0 0.0
    %312 = vmatpush1.msra.mxu0 0.0
    %313 = vmatprep.subr.mxu0 0.0
    %314 = vmatpush1.msra.mxu0 0.0
    %315 = vmatprep.subr.mxu0 0.0
    %316 = vmatpush1.msra.mxu0 0.0
    %317 = vmatprep.subr.mxu0 0.0
    %318 = vmatpush1.msra.mxu0 0.0
    %319 = vmatprep.subr.mxu0 0.0
    %320 = vmatpush1.msra.mxu0 0.0
    %321 = vmatprep.subr.mxu0 0.0
    %322 = vmatpush1.msra.mxu0 0.0
    %323 = vmatprep.subr.mxu0 0.0
    %324 = vmatpush1.msra.mxu0 0.0
    %325 = vmatprep.subr.mxu0 0.0
    %326 = vmatpush1.msra.mxu0 0.0
    %327 = vmatprep.subr.mxu0 0.0
    %328 = vmatpush1.msra.mxu0 0.0
    %329 = vmatprep.subr.mxu0 0.0
    %330 = vmatpush1.msra.mxu0 0.0
    %331 = vmatprep.subr.mxu0 0.0
    %332 = vmatpush1.msra.mxu0 0.0
    %333 = vmatprep.subr.mxu0 0.0
    %334 = vmatpush1.msra.mxu0 0.0
    %335 = vmatprep.subr.mxu0 0.0
    %336 = vmatpush1.msra.mxu0 0.0
    %337 = vmatprep.subr.mxu0 0.0
    %338 = vmatpush1.msra.mxu0 0.0
    %339 = vmatprep.subr.mxu0 0.0
    %340 = vmatpush1.msra.mxu0 0.0
    %341 = vmatprep.subr.mxu0 0.0
    %342 = vmatpush1.msra.mxu0 0.0
    %343 = vmatprep.subr.mxu0 0.0
    %344 = vmatpush1.msra.mxu0 0.0
    %345 = vmatprep.subr.mxu0 0.0
    %346 = vmatpush1.msra.mxu0 0.0
    %347 = vmatprep.subr.mxu0 0.0
    %348 = vmatpush1.msra.mxu0 0.0
    %349 = vmatprep.subr.mxu0 0.0
    %350 = vmatpush1.msra.mxu0 0.0
    %351 = vmatprep.subr.mxu0 0.0
    %352 = vmatpush1.msra.mxu0 0.0
    %353 = vmatprep.subr.mxu0 0.0
    %354 = vmatpush1.msra.mxu0 0.0
    %355 = vmatprep.subr.mxu0 0.0
    %356 = vmatpush1.msra.mxu0 0.0
    %357 = vmatprep.subr.mxu0 0.0
    %358 = vmatpush1.msra.mxu0 0.0
    %359 = vmatprep.subr.mxu0 0.0
    %360 = vmatpush1.msra.mxu0 0.0
    %361 = vmatprep.subr.mxu0 0.0
    %362 = vmatpush1.msra.mxu0 0.0
    %363 = vmatprep.subr.mxu0 0.0
    %364 = vmatpush1.msra.mxu0 0.0
    %365 = vmatprep.mubr.f32.mxu0 0.0
    %366 = vmatmul.mubr.f32.gmra.mrb[0].mxu0 %v65
    %v367 = vpop.f32.mrb[0].mxu0
    %v368 = vadd.f32 0.0, %v367
    %v369 = vpop.f32.mrb[0].mxu0
    %v370 = vadd.f32 0.0, %v369
    %371 = vmatprep.mubr.f32.mxu0 0.0
    %372 = vmatmul.mubr.f32.gmra.mrb[0].mxu0 %v68
    %v373 = vpop.f32.mrb[0].mxu0
    %v374 = vadd.f32 0.0, %v373
    %v375 = vpop.f32.mrb[0].mxu0
    %v376 = vadd.f32 0.0, %v375
    %377 = vdwg.mxu0
    %380 = vrot.lane.b32.xlu0 %v29, 32
    %v381 = vpop.permute.xlu0 %380
    %382 = vrot.lane.b32.xlu0 %v30, 32
    %v383 = vpop.permute.xlu0 %382
    %386 = vrot.lane.b32.xlu0 %v29, 64
    %v387 = vpop.permute.xlu0 %386
    %388 = vrot.lane.b32.xlu0 %v30, 64
    %v389 = vpop.permute.xlu0 %388
    %392 = vrot.lane.b32.xlu0 %v29, 96
    %v393 = vpop.permute.xlu0 %392
    %394 = vrot.lane.b32.xlu0 %v30, 96
    %v395 = vpop.permute.xlu0 %394
    %v398 = vsel %vm63, %v29, %v381
    %v399 = vsel %vm63, %v30, %v383
    %vm400 = vcmask 523264
    %v401 = vsel %vm400, %v398, %v387
    %v402 = vsel %vm400, %v399, %v389
    %vm403 = vcmask 785408
    %v404 = vsel %vm403, %v401, %v393
    %v405 = vsel %vm403, %v402, %v395
    %v406 = vmul.f32 %v137, %v404
    %v407 = vmul.f32 %v139, %v404
    %v408 = vmul.f32 %v214, %v404
    %v409 = vmul.f32 %v216, %v404
    %v410 = vmul.f32 %v291, %v404
    %v411 = vmul.f32 %v293, %v404
    %v412 = vmul.f32 %v368, %v404
    %v413 = vmul.f32 %v370, %v404
    %v414 = vmul.f32 %v143, %v405
    %v415 = vmul.f32 %v145, %v405
    %v416 = vmul.f32 %v220, %v405
    %v417 = vmul.f32 %v222, %v405
    %v418 = vmul.f32 %v297, %v405
    %v419 = vmul.f32 %v299, %v405
    %v420 = vmul.f32 %v374, %v405
    %v421 = vmul.f32 %v376, %v405
    %v422 = vld [vmem:[%s4] sm:$0xff]
    %v423 = vld [vmem:[%s4 + $0x8] sm:$0xff]
    %v424 = vld [vmem:[%s4 + $0x10] sm:$0xff]
    %v425 = vld [vmem:[%s4 + $0x18] sm:$0xff]
    %v426 = vld [vmem:[%s4 + $0x20] sm:$0xff]
    %v427 = vld [vmem:[%s4 + $0x28] sm:$0xff]
    %v428 = vld [vmem:[%s4 + $0x30] sm:$0xff]
    %v429 = vld [vmem:[%s4 + $0x38] sm:$0xff]
    %v430 = vld [vmem:[%s4 + $0x40] sm:$0xff]
    %v431 = vld [vmem:[%s4 + $0x48] sm:$0xff]
    %v432 = vld [vmem:[%s4 + $0x50] sm:$0xff]
    %v433 = vld [vmem:[%s4 + $0x58] sm:$0xff]
    %v434 = vld [vmem:[%s4 + $0x60] sm:$0xff]
    %v435 = vld [vmem:[%s4 + $0x68] sm:$0xff]
    %v436 = vld [vmem:[%s4 + $0x70] sm:$0xff]
    %v437 = vld [vmem:[%s4 + $0x78] sm:$0xff]
    %v438 = vld [vmem:[%s4 + $0x80] sm:$0xff]
    %v439 = vld [vmem:[%s4 + $0x88] sm:$0xff]
    %v440 = vld [vmem:[%s4 + $0x90] sm:$0xff]
    %v441 = vld [vmem:[%s4 + $0x98] sm:$0xff]
    %v442 = vld [vmem:[%s4 + $0xa0] sm:$0xff]
    %v443 = vld [vmem:[%s4 + $0xa8] sm:$0xff]
    %v444 = vld [vmem:[%s4 + $0xb0] sm:$0xff]
    %v445 = vld [vmem:[%s4 + $0xb8] sm:$0xff]
    %v446 = vld [vmem:[%s4 + $0xc0] sm:$0xff]
    %v447 = vld [vmem:[%s4 + $0xc8] sm:$0xff]
    %v448 = vld [vmem:[%s4 + $0xd0] sm:$0xff]
    %v449 = vld [vmem:[%s4 + $0xd8] sm:$0xff]
    %v450 = vld [vmem:[%s4 + $0xe0] sm:$0xff]
    %v451 = vld [vmem:[%s4 + $0xe8] sm:$0xff]
    %v452 = vld [vmem:[%s4 + $0xf0] sm:$0xff]
    %v453 = vld [vmem:[%s4 + $0xf8] sm:$0xff]
    %v454 = vld [vmem:[%s4 + $0x100] sm:$0xff]
    %v455 = vld [vmem:[%s4 + $0x108] sm:$0xff]
    %v456 = vld [vmem:[%s4 + $0x110] sm:$0xff]
    %v457 = vld [vmem:[%s4 + $0x118] sm:$0xff]
    %v458 = vld [vmem:[%s4 + $0x120] sm:$0xff]
    %v459 = vld [vmem:[%s4 + $0x128] sm:$0xff]
    %v460 = vld [vmem:[%s4 + $0x130] sm:$0xff]
    %v461 = vld [vmem:[%s4 + $0x138] sm:$0xff]
    %v462 = vld [vmem:[%s4 + $0x140] sm:$0xff]
    %v463 = vld [vmem:[%s4 + $0x148] sm:$0xff]
    %v464 = vld [vmem:[%s4 + $0x150] sm:$0xff]
    %v465 = vld [vmem:[%s4 + $0x158] sm:$0xff]
    %v466 = vld [vmem:[%s4 + $0x160] sm:$0xff]
    %v467 = vld [vmem:[%s4 + $0x168] sm:$0xff]
    %v468 = vld [vmem:[%s4 + $0x170] sm:$0xff]
    %v469 = vld [vmem:[%s4 + $0x178] sm:$0xff]
    %v470 = vld [vmem:[%s4 + $0x180] sm:$0xff]
    %v471 = vld [vmem:[%s4 + $0x188] sm:$0xff]
    %v472 = vld [vmem:[%s4 + $0x190] sm:$0xff]
    %v473 = vld [vmem:[%s4 + $0x198] sm:$0xff]
    %v474 = vld [vmem:[%s4 + $0x1a0] sm:$0xff]
    %v475 = vld [vmem:[%s4 + $0x1a8] sm:$0xff]
    %v476 = vld [vmem:[%s4 + $0x1b0] sm:$0xff]
    %v477 = vld [vmem:[%s4 + $0x1b8] sm:$0xff]
    %v478 = vld [vmem:[%s4 + $0x1c0] sm:$0xff]
    %v479 = vld [vmem:[%s4 + $0x1c8] sm:$0xff]
    %v480 = vld [vmem:[%s4 + $0x1d0] sm:$0xff]
    %v481 = vld [vmem:[%s4 + $0x1d8] sm:$0xff]
    %v482 = vld [vmem:[%s4 + $0x1e0] sm:$0xff]
    %v483 = vld [vmem:[%s4 + $0x1e8] sm:$0xff]
    %v484 = vld [vmem:[%s4 + $0x1f0] sm:$0xff]
    %v485 = vld [vmem:[%s4 + $0x1f8] sm:$0xff]
    %v486 = vld [vmem:[%s4 + $0x200] sm:$0xff]
    %v487 = vld [vmem:[%s4 + $0x208] sm:$0xff]
    %v488 = vld [vmem:[%s4 + $0x210] sm:$0xff]
    %v489 = vld [vmem:[%s4 + $0x218] sm:$0xff]
    %v490 = vld [vmem:[%s4 + $0x220] sm:$0xff]
    %v491 = vld [vmem:[%s4 + $0x228] sm:$0xff]
    %v492 = vld [vmem:[%s4 + $0x230] sm:$0xff]
    %v493 = vld [vmem:[%s4 + $0x238] sm:$0xff]
    %v494 = vld [vmem:[%s4 + $0x240] sm:$0xff]
    %v495 = vld [vmem:[%s4 + $0x248] sm:$0xff]
    %v496 = vld [vmem:[%s4 + $0x250] sm:$0xff]
    %v497 = vld [vmem:[%s4 + $0x258] sm:$0xff]
    %v498 = vld [vmem:[%s4 + $0x260] sm:$0xff]
    %v499 = vld [vmem:[%s4 + $0x268] sm:$0xff]
    %v500 = vld [vmem:[%s4 + $0x270] sm:$0xff]
    %v501 = vld [vmem:[%s4 + $0x278] sm:$0xff]
    %v502 = vld [vmem:[%s4 + $0x280] sm:$0xff]
    %v503 = vld [vmem:[%s4 + $0x288] sm:$0xff]
    %v504 = vld [vmem:[%s4 + $0x290] sm:$0xff]
    %v505 = vld [vmem:[%s4 + $0x298] sm:$0xff]
    %v506 = vld [vmem:[%s4 + $0x2a0] sm:$0xff]
    %v507 = vld [vmem:[%s4 + $0x2a8] sm:$0xff]
    %v508 = vld [vmem:[%s4 + $0x2b0] sm:$0xff]
    %v509 = vld [vmem:[%s4 + $0x2b8] sm:$0xff]
    %v510 = vld [vmem:[%s4 + $0x2c0] sm:$0xff]
    %v511 = vld [vmem:[%s4 + $0x2c8] sm:$0xff]
    %v512 = vld [vmem:[%s4 + $0x2d0] sm:$0xff]
    %v513 = vld [vmem:[%s4 + $0x2d8] sm:$0xff]
    %v514 = vld [vmem:[%s4 + $0x2e0] sm:$0xff]
    %v515 = vld [vmem:[%s4 + $0x2e8] sm:$0xff]
    %v516 = vld [vmem:[%s4 + $0x2f0] sm:$0xff]
    %v517 = vld [vmem:[%s4 + $0x2f8] sm:$0xff]
    %v518 = vld [vmem:[%s4 + $0x300] sm:$0xff]
    %v519 = vld [vmem:[%s4 + $0x308] sm:$0xff]
    %v520 = vld [vmem:[%s4 + $0x310] sm:$0xff]
    %v521 = vld [vmem:[%s4 + $0x318] sm:$0xff]
    %v522 = vld [vmem:[%s4 + $0x320] sm:$0xff]
    %v523 = vld [vmem:[%s4 + $0x328] sm:$0xff]
    %v524 = vld [vmem:[%s4 + $0x330] sm:$0xff]
    %v525 = vld [vmem:[%s4 + $0x338] sm:$0xff]
    %v526 = vld [vmem:[%s4 + $0x340] sm:$0xff]
    %v527 = vld [vmem:[%s4 + $0x348] sm:$0xff]
    %v528 = vld [vmem:[%s4 + $0x350] sm:$0xff]
    %v529 = vld [vmem:[%s4 + $0x358] sm:$0xff]
    %v530 = vld [vmem:[%s4 + $0x360] sm:$0xff]
    %v531 = vld [vmem:[%s4 + $0x368] sm:$0xff]
    %v532 = vld [vmem:[%s4 + $0x370] sm:$0xff]
    %v533 = vld [vmem:[%s4 + $0x378] sm:$0xff]
    %v534 = vld [vmem:[%s4 + $0x380] sm:$0xff]
    %v535 = vld [vmem:[%s4 + $0x388] sm:$0xff]
    %v536 = vld [vmem:[%s4 + $0x390] sm:$0xff]
    %v537 = vld [vmem:[%s4 + $0x398] sm:$0xff]
    %v538 = vld [vmem:[%s4 + $0x3a0] sm:$0xff]
    %v539 = vld [vmem:[%s4 + $0x3a8] sm:$0xff]
    %v540 = vld [vmem:[%s4 + $0x3b0] sm:$0xff]
    %v541 = vld [vmem:[%s4 + $0x3b8] sm:$0xff]
    %v542 = vld [vmem:[%s4 + $0x3c0] sm:$0xff]
    %v543 = vld [vmem:[%s4 + $0x3c8] sm:$0xff]
    %v544 = vld [vmem:[%s4 + $0x3d0] sm:$0xff]
    %v545 = vld [vmem:[%s4 + $0x3d8] sm:$0xff]
    %v546 = vld [vmem:[%s4 + $0x3e0] sm:$0xff]
    %v547 = vld [vmem:[%s4 + $0x3e8] sm:$0xff]
    %v548 = vld [vmem:[%s4 + $0x3f0] sm:$0xff]
    %v549 = vld [vmem:[%s4 + $0x3f8] sm:$0xff]
    %v550 = vld [vmem:[%s3] sm:$0x1]
    %v552 = vlaneseq
    %v553 = vshrl.u32 %v552, 7
    %v554 = vsub.s32 0, %v553
    %v555 = vrot.slane %v550, %v554
    %557 = vmatprep.subr.mxu0 0.0
    %558 = vmatpush1.msra.mxu0 %v422
    %559 = vmatprep.subr.mxu0 0.0
    %560 = vmatpush1.msra.mxu0 %v423
    %561 = vmatprep.subr.mxu0 0.0
    %562 = vmatpush1.msra.mxu0 %v424
    %563 = vmatprep.subr.mxu0 0.0
    %564 = vmatpush1.msra.mxu0 %v425
    %565 = vmatprep.subr.mxu0 0.0
    %566 = vmatpush1.msra.mxu0 %v426
    %567 = vmatprep.subr.mxu0 0.0
    %568 = vmatpush1.msra.mxu0 %v427
    %569 = vmatprep.subr.mxu0 0.0
    %570 = vmatpush1.msra.mxu0 %v428
    %571 = vmatprep.subr.mxu0 0.0
    %572 = vmatpush1.msra.mxu0 %v429
    %573 = vmatprep.subr.mxu0 0.0
    %574 = vmatpush1.msra.mxu0 %v430
    %575 = vmatprep.subr.mxu0 0.0
    %576 = vmatpush1.msra.mxu0 %v431
    %577 = vmatprep.subr.mxu0 0.0
    %578 = vmatpush1.msra.mxu0 %v432
    %579 = vmatprep.subr.mxu0 0.0
    %580 = vmatpush1.msra.mxu0 %v433
    %581 = vmatprep.subr.mxu0 0.0
    %582 = vmatpush1.msra.mxu0 %v434
    %583 = vmatprep.subr.mxu0 0.0
    %584 = vmatpush1.msra.mxu0 %v435
    %585 = vmatprep.subr.mxu0 0.0
    %586 = vmatpush1.msra.mxu0 %v436
    %587 = vmatprep.subr.mxu0 0.0
    %588 = vmatpush1.msra.mxu0 %v437
    %589 = vmatprep.subr.mxu0 0.0
    %590 = vmatpush1.msra.mxu0 %v438
    %591 = vmatprep.subr.mxu0 0.0
    %592 = vmatpush1.msra.mxu0 %v439
    %593 = vmatprep.subr.mxu0 0.0
    %594 = vmatpush1.msra.mxu0 %v440
    %595 = vmatprep.subr.mxu0 0.0
    %596 = vmatpush1.msra.mxu0 %v441
    %597 = vmatprep.subr.mxu0 0.0
    %598 = vmatpush1.msra.mxu0 %v442
    %599 = vmatprep.subr.mxu0 0.0
    %600 = vmatpush1.msra.mxu0 %v443
    %601 = vmatprep.subr.mxu0 0.0
    %602 = vmatpush1.msra.mxu0 %v444
    %603 = vmatprep.subr.mxu0 0.0
    %604 = vmatpush1.msra.mxu0 %v445
    %605 = vmatprep.subr.mxu0 0.0
    %606 = vmatpush1.msra.mxu0 %v446
    %607 = vmatprep.subr.mxu0 0.0
    %608 = vmatpush1.msra.mxu0 %v447
    %609 = vmatprep.subr.mxu0 0.0
    %610 = vmatpush1.msra.mxu0 %v448
    %611 = vmatprep.subr.mxu0 0.0
    %612 = vmatpush1.msra.mxu0 %v449
    %613 = vmatprep.subr.mxu0 0.0
    %614 = vmatpush1.msra.mxu0 %v450
    %615 = vmatprep.subr.mxu0 0.0
    %616 = vmatpush1.msra.mxu0 %v451
    %617 = vmatprep.subr.mxu0 0.0
    %618 = vmatpush1.msra.mxu0 %v452
    %619 = vmatprep.subr.mxu0 0.0
    %620 = vmatpush1.msra.mxu0 %v453
    %621 = vmatprep.mubr.f32.mxu0 %v407
    %622 = vmatmul.mubr.f32.gmra.mrb[0].mxu0 %v406
    %v623 = vpop.f32.mrb[0].mxu0
    %v624 = vadd.f32 %v555, %v623
    %v625 = vpop.f32.mrb[0].mxu0
    %626 = vmatprep.mubr.f32.mxu0 %v415
    %627 = vmatmul.mubr.f32.gmra.mrb[0].mxu0 %v414
    %v628 = vpop.f32.mrb[0].mxu0
    %v629 = vadd.f32 %v555, %v628
    %v630 = vpop.f32.mrb[0].mxu0
    %631 = vdwg.mxu0
    %632 = vmatprep.subr.mxu0 0.0
    %633 = vmatpush1.msra.mxu0 %v454
    %634 = vmatprep.subr.mxu0 0.0
    %635 = vmatpush1.msra.mxu0 %v455
    %636 = vmatprep.subr.mxu0 0.0
    %637 = vmatpush1.msra.mxu0 %v456
    %638 = vmatprep.subr.mxu0 0.0
    %639 = vmatpush1.msra.mxu0 %v457
    %640 = vmatprep.subr.mxu0 0.0
    %641 = vmatpush1.msra.mxu0 %v458
    %642 = vmatprep.subr.mxu0 0.0
    %643 = vmatpush1.msra.mxu0 %v459
    %644 = vmatprep.subr.mxu0 0.0
    %645 = vmatpush1.msra.mxu0 %v460
    %646 = vmatprep.subr.mxu0 0.0
    %647 = vmatpush1.msra.mxu0 %v461
    %648 = vmatprep.subr.mxu0 0.0
    %649 = vmatpush1.msra.mxu0 %v462
    %650 = vmatprep.subr.mxu0 0.0
    %651 = vmatpush1.msra.mxu0 %v463
    %652 = vmatprep.subr.mxu0 0.0
    %653 = vmatpush1.msra.mxu0 %v464
    %654 = vmatprep.subr.mxu0 0.0
    %655 = vmatpush1.msra.mxu0 %v465
    %656 = vmatprep.subr.mxu0 0.0
    %657 = vmatpush1.msra.mxu0 %v466
    %658 = vmatprep.subr.mxu0 0.0
    %659 = vmatpush1.msra.mxu0 %v467
    %660 = vmatprep.subr.mxu0 0.0
    %661 = vmatpush1.msra.mxu0 %v468
    %662 = vmatprep.subr.mxu0 0.0
    %663 = vmatpush1.msra.mxu0 %v469
    %664 = vmatprep.subr.mxu0 0.0
    %665 = vmatpush1.msra.mxu0 %v470
    %666 = vmatprep.subr.mxu0 0.0
    %667 = vmatpush1.msra.mxu0 %v471
    %668 = vmatprep.subr.mxu0 0.0
    %669 = vmatpush1.msra.mxu0 %v472
    %670 = vmatprep.subr.mxu0 0.0
    %671 = vmatpush1.msra.mxu0 %v473
    %672 = vmatprep.subr.mxu0 0.0
    %673 = vmatpush1.msra.mxu0 %v474
    %674 = vmatprep.subr.mxu0 0.0
    %675 = vmatpush1.msra.mxu0 %v475
    %676 = vmatprep.subr.mxu0 0.0
    %677 = vmatpush1.msra.mxu0 %v476
    %678 = vmatprep.subr.mxu0 0.0
    %679 = vmatpush1.msra.mxu0 %v477
    %680 = vmatprep.subr.mxu0 0.0
    %681 = vmatpush1.msra.mxu0 %v478
    %682 = vmatprep.subr.mxu0 0.0
    %683 = vmatpush1.msra.mxu0 %v479
    %684 = vmatprep.subr.mxu0 0.0
    %685 = vmatpush1.msra.mxu0 %v480
    %686 = vmatprep.subr.mxu0 0.0
    %687 = vmatpush1.msra.mxu0 %v481
    %688 = vmatprep.subr.mxu0 0.0
    %689 = vmatpush1.msra.mxu0 %v482
    %690 = vmatprep.subr.mxu0 0.0
    %691 = vmatpush1.msra.mxu0 %v483
    %692 = vmatprep.subr.mxu0 0.0
    %693 = vmatpush1.msra.mxu0 %v484
    %694 = vmatprep.subr.mxu0 0.0
    %695 = vmatpush1.msra.mxu0 %v485
    %696 = vmatprep.mubr.f32.mxu0 %v409
    %697 = vmatmul.mubr.f32.gmra.mrb[0].mxu0 %v408
    %v698 = vpop.f32.mrb[0].mxu0
    %v699 = vadd.f32 %v624, %v698
    %v700 = vpop.f32.mrb[0].mxu0
    %701 = vmatprep.mubr.f32.mxu0 %v417
    %702 = vmatmul.mubr.f32.gmra.mrb[0].mxu0 %v416
    %v703 = vpop.f32.mrb[0].mxu0
    %v704 = vadd.f32 %v629, %v703
    %v705 = vpop.f32.mrb[0].mxu0
    %706 = vdwg.mxu0
    %707 = vmatprep.subr.mxu0 0.0
    %708 = vmatpush1.msra.mxu0 %v486
    %709 = vmatprep.subr.mxu0 0.0
    %710 = vmatpush1.msra.mxu0 %v487
    %711 = vmatprep.subr.mxu0 0.0
    %712 = vmatpush1.msra.mxu0 %v488
    %713 = vmatprep.subr.mxu0 0.0
    %714 = vmatpush1.msra.mxu0 %v489
    %715 = vmatprep.subr.mxu0 0.0
    %716 = vmatpush1.msra.mxu0 %v490
    %717 = vmatprep.subr.mxu0 0.0
    %718 = vmatpush1.msra.mxu0 %v491
    %719 = vmatprep.subr.mxu0 0.0
    %720 = vmatpush1.msra.mxu0 %v492
    %721 = vmatprep.subr.mxu0 0.0
    %722 = vmatpush1.msra.mxu0 %v493
    %723 = vmatprep.subr.mxu0 0.0
    %724 = vmatpush1.msra.mxu0 %v494
    %725 = vmatprep.subr.mxu0 0.0
    %726 = vmatpush1.msra.mxu0 %v495
    %727 = vmatprep.subr.mxu0 0.0
    %728 = vmatpush1.msra.mxu0 %v496
    %729 = vmatprep.subr.mxu0 0.0
    %730 = vmatpush1.msra.mxu0 %v497
    %731 = vmatprep.subr.mxu0 0.0
    %732 = vmatpush1.msra.mxu0 %v498
    %733 = vmatprep.subr.mxu0 0.0
    %734 = vmatpush1.msra.mxu0 %v499
    %735 = vmatprep.subr.mxu0 0.0
    %736 = vmatpush1.msra.mxu0 %v500
    %737 = vmatprep.subr.mxu0 0.0
    %738 = vmatpush1.msra.mxu0 %v501
    %739 = vmatprep.subr.mxu0 0.0
    %740 = vmatpush1.msra.mxu0 %v502
    %741 = vmatprep.subr.mxu0 0.0
    %742 = vmatpush1.msra.mxu0 %v503
    %743 = vmatprep.subr.mxu0 0.0
    %744 = vmatpush1.msra.mxu0 %v504
    %745 = vmatprep.subr.mxu0 0.0
    %746 = vmatpush1.msra.mxu0 %v505
    %747 = vmatprep.subr.mxu0 0.0
    %748 = vmatpush1.msra.mxu0 %v506
    %749 = vmatprep.subr.mxu0 0.0
    %750 = vmatpush1.msra.mxu0 %v507
    %751 = vmatprep.subr.mxu0 0.0
    %752 = vmatpush1.msra.mxu0 %v508
    %753 = vmatprep.subr.mxu0 0.0
    %754 = vmatpush1.msra.mxu0 %v509
    %755 = vmatprep.subr.mxu0 0.0
    %756 = vmatpush1.msra.mxu0 %v510
    %757 = vmatprep.subr.mxu0 0.0
    %758 = vmatpush1.msra.mxu0 %v511
    %759 = vmatprep.subr.mxu0 0.0
    %760 = vmatpush1.msra.mxu0 %v512
    %761 = vmatprep.subr.mxu0 0.0
    %762 = vmatpush1.msra.mxu0 %v513
    %763 = vmatprep.subr.mxu0 0.0
    %764 = vmatpush1.msra.mxu0 %v514
    %765 = vmatprep.subr.mxu0 0.0
    %766 = vmatpush1.msra.mxu0 %v515
    %767 = vmatprep.subr.mxu0 0.0
    %768 = vmatpush1.msra.mxu0 %v516
    %769 = vmatprep.subr.mxu0 0.0
    %770 = vmatpush1.msra.mxu0 %v517
    %771 = vmatprep.mubr.f32.mxu0 %v411
    %772 = vmatmul.mubr.f32.gmra.mrb[0].mxu0 %v410
    %v773 = vpop.f32.mrb[0].mxu0
    %v774 = vadd.f32 %v699, %v773
    %v775 = vpop.f32.mrb[0].mxu0
    %776 = vmatprep.mubr.f32.mxu0 %v419
    %777 = vmatmul.mubr.f32.gmra.mrb[0].mxu0 %v418
    %v778 = vpop.f32.mrb[0].mxu0
    %v779 = vadd.f32 %v704, %v778
    %v780 = vpop.f32.mrb[0].mxu0
    %781 = vdwg.mxu0
    %782 = vmatprep.subr.mxu0 0.0
    %783 = vmatpush1.msra.mxu0 %v518
    %784 = vmatprep.subr.mxu0 0.0
    %785 = vmatpush1.msra.mxu0 %v519
    %786 = vmatprep.subr.mxu0 0.0
    %787 = vmatpush1.msra.mxu0 %v520
    %788 = vmatprep.subr.mxu0 0.0
    %789 = vmatpush1.msra.mxu0 %v521
    %790 = vmatprep.subr.mxu0 0.0
    %791 = vmatpush1.msra.mxu0 %v522
    %792 = vmatprep.subr.mxu0 0.0
    %793 = vmatpush1.msra.mxu0 %v523
    %794 = vmatprep.subr.mxu0 0.0
    %795 = vmatpush1.msra.mxu0 %v524
    %796 = vmatprep.subr.mxu0 0.0
    %797 = vmatpush1.msra.mxu0 %v525
    %798 = vmatprep.subr.mxu0 0.0
    %799 = vmatpush1.msra.mxu0 %v526
    %800 = vmatprep.subr.mxu0 0.0
    %801 = vmatpush1.msra.mxu0 %v527
    %802 = vmatprep.subr.mxu0 0.0
    %803 = vmatpush1.msra.mxu0 %v528
    %804 = vmatprep.subr.mxu0 0.0
    %805 = vmatpush1.msra.mxu0 %v529
    %806 = vmatprep.subr.mxu0 0.0
    %807 = vmatpush1.msra.mxu0 %v530
    %808 = vmatprep.subr.mxu0 0.0
    %809 = vmatpush1.msra.mxu0 %v531
    %810 = vmatprep.subr.mxu0 0.0
    %811 = vmatpush1.msra.mxu0 %v532
    %812 = vmatprep.subr.mxu0 0.0
    %813 = vmatpush1.msra.mxu0 %v533
    %814 = vmatprep.subr.mxu0 0.0
    %815 = vmatpush1.msra.mxu0 %v534
    %816 = vmatprep.subr.mxu0 0.0
    %817 = vmatpush1.msra.mxu0 %v535
    %818 = vmatprep.subr.mxu0 0.0
    %819 = vmatpush1.msra.mxu0 %v536
    %820 = vmatprep.subr.mxu0 0.0
    %821 = vmatpush1.msra.mxu0 %v537
    %822 = vmatprep.subr.mxu0 0.0
    %823 = vmatpush1.msra.mxu0 %v538
    %824 = vmatprep.subr.mxu0 0.0
    %825 = vmatpush1.msra.mxu0 %v539
    %826 = vmatprep.subr.mxu0 0.0
    %827 = vmatpush1.msra.mxu0 %v540
    %828 = vmatprep.subr.mxu0 0.0
    %829 = vmatpush1.msra.mxu0 %v541
    %830 = vmatprep.subr.mxu0 0.0
    %831 = vmatpush1.msra.mxu0 %v542
    %832 = vmatprep.subr.mxu0 0.0
    %833 = vmatpush1.msra.mxu0 %v543
    %834 = vmatprep.subr.mxu0 0.0
    %835 = vmatpush1.msra.mxu0 %v544
    %836 = vmatprep.subr.mxu0 0.0
    %837 = vmatpush1.msra.mxu0 %v545
    %838 = vmatprep.subr.mxu0 0.0
    %839 = vmatpush1.msra.mxu0 %v546
    %840 = vmatprep.subr.mxu0 0.0
    %841 = vmatpush1.msra.mxu0 %v547
    %842 = vmatprep.subr.mxu0 0.0
    %843 = vmatpush1.msra.mxu0 %v548
    %844 = vmatprep.subr.mxu0 0.0
    %845 = vmatpush1.msra.mxu0 %v549
    %846 = vmatprep.mubr.f32.mxu0 %v413
    %847 = vmatmul.mubr.f32.gmra.mrb[0].mxu0 %v412
    %v848 = vpop.f32.mrb[0].mxu0
    %v849 = vadd.f32 %v774, %v848
    %v850 = vpop.f32.mrb[0].mxu0
    %851 = vmatprep.mubr.f32.mxu0 %v421
    %852 = vmatmul.mubr.f32.gmra.mrb[0].mxu0 %v420
    %v853 = vpop.f32.mrb[0].mxu0
    %v854 = vadd.f32 %v779, %v853
    %v855 = vpop.f32.mrb[0].mxu0
    %856 = vdwg.mxu0
    %v857 = vmax.f32 %v849, 0.0
    %v858 = vmax.f32 %v854, 0.0
    %v859 = vld [vmem:[%s5] sm:$0xff]
    %v860 = vld [vmem:[%s5 + $0x8] sm:$0xff]
    %v861 = vld [vmem:[%s5 + $0x10] sm:$0xff]
    %v862 = vld [vmem:[%s5 + $0x18] sm:$0xff]
    %v863 = vld [vmem:[%s6] sm:$0x1]
    %v865 = vlaneseq
    %v866 = vshrl.u32 %v865, 7
    %v867 = vsub.s32 0, %v866
    %v868 = vrot.slane %v863, %v867
    %v871 = vsel %vm63, %v857, 0
    %v874 = vsel %vm63, %v858, 0
    %876 = vmatprep.subr.mxu0 0.0
    %877 = vmatpush1.msra.mxu0 %v859
    %878 = vmatprep.subr.mxu0 0.0
    %879 = vmatpush1.msra.mxu0 %v860
    %880 = vmatprep.subr.mxu0 0.0
    %881 = vmatpush1.msra.mxu0 %v861
    %882 = vmatprep.subr.mxu0 0.0
    %883 = vmatpush1.msra.mxu0 %v862
    %884 = vmatprep.subr.mxu0 0.0
    %885 = vmatpush1.msra.mxu0 0.0
    %886 = vmatprep.subr.mxu0 0.0
    %887 = vmatpush1.msra.mxu0 0.0
    %888 = vmatprep.subr.mxu0 0.0
    %889 = vmatpush1.msra.mxu0 0.0
    %890 = vmatprep.subr.mxu0 0.0
    %891 = vmatpush1.msra.mxu0 0.0
    %892 = vmatprep.subr.mxu0 0.0
    %893 = vmatpush1.msra.mxu0 0.0
    %894 = vmatprep.subr.mxu0 0.0
    %895 = vmatpush1.msra.mxu0 0.0
    %896 = vmatprep.subr.mxu0 0.0
    %897 = vmatpush1.msra.mxu0 0.0
    %898 = vmatprep.subr.mxu0 0.0
    %899 = vmatpush1.msra.mxu0 0.0
    %900 = vmatprep.subr.mxu0 0.0
    %901 = vmatpush1.msra.mxu0 0.0
    %902 = vmatprep.subr.mxu0 0.0
    %903 = vmatpush1.msra.mxu0 0.0
    %904 = vmatprep.subr.mxu0 0.0
    %905 = vmatpush1.msra.mxu0 0.0
    %906 = vmatprep.subr.mxu0 0.0
    %907 = vmatpush1.msra.mxu0 0.0
    %908 = vmatprep.subr.mxu0 0.0
    %909 = vmatpush1.msra.mxu0 0.0
    %910 = vmatprep.subr.mxu0 0.0
    %911 = vmatpush1.msra.mxu0 0.0
    %912 = vmatprep.subr.mxu0 0.0
    %913 = vmatpush1.msra.mxu0 0.0
    %914 = vmatprep.subr.mxu0 0.0
    %915 = vmatpush1.msra.mxu0 0.0
    %916 = vmatprep.subr.mxu0 0.0
    %917 = vmatpush1.msra.mxu0 0.0
    %918 = vmatprep.subr.mxu0 0.0
    %919 = vmatpush1.msra.mxu0 0.0
    %920 = vmatprep.subr.mxu0 0.0
    %921 = vmatpush1.msra.mxu0 0.0
    %922 = vmatprep.subr.mxu0 0.0
    %923 = vmatpush1.msra.mxu0 0.0
    %924 = vmatprep.subr.mxu0 0.0
    %925 = vmatpush1.msra.mxu0 0.0
    %926 = vmatprep.subr.mxu0 0.0
    %927 = vmatpush1.msra.mxu0 0.0
    %928 = vmatprep.subr.mxu0 0.0
    %929 = vmatpush1.msra.mxu0 0.0
    %930 = vmatprep.subr.mxu0 0.0
    %931 = vmatpush1.msra.mxu0 0.0
    %932 = vmatprep.subr.mxu0 0.0
    %933 = vmatpush1.msra.mxu0 0.0
    %934 = vmatprep.subr.mxu0 0.0
    %935 = vmatpush1.msra.mxu0 0.0
    %936 = vmatprep.subr.mxu0 0.0
    %937 = vmatpush1.msra.mxu0 0.0
    %938 = vmatprep.subr.mxu0 0.0
    %939 = vmatpush1.msra.mxu0 0.0
    %940 = vmatprep.mubr.f32.mxu0 0.0
    %941 = vmatmul.mubr.f32.gmra.mrb[0].mxu0 %v871
    %v942 = vpop.f32.mrb[0].mxu0
    %v943 = vadd.f32 %v868, %v942
    %v944 = vpop.f32.mrb[0].mxu0
    %945 = vmatprep.mubr.f32.mxu0 0.0
    %946 = vmatmul.mubr.f32.gmra.mrb[0].mxu0 %v874
    %v947 = vpop.f32.mrb[0].mxu0
    %v948 = vadd.f32 %v868, %v947
    %v949 = vpop.f32.mrb[0].mxu0
    %950 = vdwg.mxu0
    %951 = vmax.xlane.f32.xlu0 %v943
    %v952 = vpop.xlane.xlu0 %951
    %953 = vmax.xlane.f32.xlu0 %v948
    %v954 = vpop.xlane.xlu0 %953
    %v955 = vsub.f32 %v943, %v952
    %v956 = vsub.f32 %v948, %v954
    %v957 = vmul.f32 %v955, 1.442695
    %v958 = vpow.pop %v957
    %v959 = vmul.f32 %v956, 1.442695
    %v960 = vpow.pop %v959
    %961 = vadd.xlane.f32.xlu0 %v958
    %v962 = vpop.xlane.xlu0 %961
    %963 = vadd.xlane.f32.xlu0 %v960
    %v964 = vpop.xlane.xlu0 %963
    %v965 = vlog2.pop %v962
    %v966 = vmul.f32 %v965, 0.6931472
    %v967 = vlog2.pop %v964
    %v968 = vmul.f32 %v967, 0.6931472
    %v969 = vsub.f32 %v955, %v966
    %v970 = vsub.f32 %v956, %v968
    %971 = vst [vmem:[#allocation2] sm:$0xff] %v969
    %972 = vst [vmem:[#allocation2 + $0x8] sm:$0xff] %v970
    // Predicated region
    $region30: #{tpu_custom_call.1} parent=1 // pred_check
      _
    $region31: #{tpu_custom_call.1} parent=1 // pred_check_branch
      %974 = sbr.rel (0) target = $region33
    $region32: #{tpu_custom_call.1} parent=1 // pred_region
      %s976 = ssub.s32 256, 256
      %977 = vsyncadd [#allocation3], %s976
      %s978 = sshll.u32 [#allocation2], 4
      %s979 = int_to_ptr.vmem [resolvable:$true] %s978
      %984 = dma.vmem_to_hbm [thread:$0]  %s979, 256, %s7, [#allocation3], 128, 128, 8
    $region33: #{tpu_custom_call.1} parent=1 // pred_fallthru
      _
    // Predicated region
    $region34: #{tpu_custom_call.1} parent=1 // pred_check
      _
    $region35: #{tpu_custom_call.1} parent=1 // pred_check_branch
      %986 = sbr.rel (0) target = $region37
    $region36: #{tpu_custom_call.1} parent=1 // pred_region
      %987 = dma.done [#allocation3], 256
    $region37: #{tpu_custom_call.1} parent=1 // pred_fallthru
      _
    %988 = vsyncpa [#allocation3], 1

</llo_original>
